<compile_context>
chip_gen: v5e
topology: v5e:2x2
jax: 0.10.0
libtpu: 0.0.40
codegen_flags: <defaults>
</compile_context>

<pallas_src>
import jax
import jax.numpy as jnp
from jax.experimental import pallas as pl
from jax.experimental.pallas import tpu as pltpu


# Offsets into the packed parameter vector (weights stored as [in, out], row-major).
W1_OFF = 0            # 2*5 = 10
B1_OFF = W1_OFF + 10  # 5
W2_OFF = B1_OFF + 5   # 5*3 = 15
B2_OFF = W2_OFF + 15  # 3
W3_OFF = B2_OFF + 3   # 3
B3_OFF = W3_OFF + 3   # 1
N_PARAMS = B3_OFF + 1  # 37


def mlp_kernel(p_ref, x_ref, o_ref):
    # p_ref: [N_PARAMS] f32 in SMEM (scalar reads)
    # x_ref: [2, tile_r, C]  (feature on leading axis; batch fills (sublane, lane))
    # o_ref: [tile_r, C]
    x0 = x_ref[0]                          # [tile_r, C]
    x1 = x_ref[1]                          # [tile_r, C]

    # Layer 1 (Linear 2->5, Dropout=identity, ReLU) interleaved with layer 2
    # accumulation (Linear 5->3): each h1_i is consumed immediately so only
    # ~6 full-block temporaries stay live (x0, x1, h, acc[0..2]).
    acc = [None, None, None]
    for i in range(5):
        h = jnp.maximum(
            x0 * p_ref[W1_OFF + i]              # w1[0, i]
            + x1 * p_ref[W1_OFF + 5 + i]        # w1[1, i]
            + p_ref[B1_OFF + i], 0.0)
        for j in range(3):
            c = h * p_ref[W2_OFF + i * 3 + j]   # w2[i, j]
            acc[j] = c if acc[j] is None else acc[j] + c

    # Layer 2 bias + ReLU (Dropout=identity), then layer 3 (Linear 3->1).
    z = None
    for j in range(3):
        h2 = jnp.maximum(acc[j] + p_ref[B2_OFF + j], 0.0)
        t = h2 * p_ref[W3_OFF + j]              # w3[j, 0]
        z = t if z is None else z + t
    z = z + p_ref[B3_OFF]

    # sigmoid(z) == 0.5 * tanh(0.5 * z) + 0.5  (tanh runs on the EUP slot).
    o_ref[...] = (0.5 * jnp.tanh(0.5 * z) + 0.5).astype(o_ref.dtype)


def pack_params(params):
    w1, b1, w2, b2, w3, b3 = params
    return jnp.concatenate([
        w1.reshape(-1), b1.reshape(-1),
        w2.reshape(-1), b2.reshape(-1),
        w3.reshape(-1), b3.reshape(-1),
    ]).astype(jnp.float32)


def _round_up(a, b):
    return (a + b - 1) // b * b


def cl_model_forward(x, params, *, lane_width=1024, max_tile_r=256):
    """x: [N, 2] float32 -> [N, 1] float32 (forward pass of cl_model, eval mode)."""
    n, d_in = x.shape
    assert d_in == 2

    # Batch layout: flatten N into (R_pad rows x C lanes) dense (8,128) tiles.
    # Small batches use a single 128-lane column to keep padding tiny.
    C = 128 if n <= 8 * 128 else lane_width
    R = _round_up(-(-n // C), 8)                 # sublane rows, multiple of 8
    tile_r = min(max_tile_r, R)
    # v7x has 2 TensorCores: if there is enough work, make >= 2 grid steps.
    if R // tile_r < 2 and R >= 16:
        tile_r = max(8, (tile_r // 2) // 8 * 8)
    R_pad = _round_up(R, tile_r)
    n_pad = R_pad * C
    grid = (R_pad // tile_r,)

    # Feature-major, padded, reshaped to [2, R_pad, C].  jnp.pad avoids the
    # zero-fill + dynamic-update-slice of the previous zeros().at[].set().
    xt = jnp.pad(x.T.astype(jnp.float32), ((0, 0), (0, n_pad - n)))
    xt = xt.reshape(2, R_pad, C)
    packed = pack_params(params)

    out = pl.pallas_call(
        mlp_kernel,
        out_shape=jax.ShapeDtypeStruct((R_pad, C), jnp.float32),
        grid=grid,
        in_specs=[
            # All 37 weight/bias scalars in SMEM, single operand.
            pl.BlockSpec(memory_space=pltpu.MemorySpace.SMEM),
            # ~2 MiB input block per step at the default tile (2, 256, 1024).
            pl.BlockSpec((2, tile_r, C), lambda i: (0, i, 0)),
        ],
        out_specs=pl.BlockSpec((tile_r, C), lambda i: (i, 0)),
        compiler_params=pltpu.CompilerParams(
            dimension_semantics=("parallel",),
            vmem_limit_bytes=32 * 1024 * 1024),
    )(packed, xt)

    # Padded tail rows hold sigmoid(bias) garbage; sliced off here.
    return out.reshape(n_pad)[:n].reshape(n, 1)


def init_params(key):
    """Deterministic init mimicking PyTorch nn.Linear default:
    U(-1/sqrt(fan_in), 1/sqrt(fan_in)) for both weight and bias.
    Weights stored as [in, out] (transposed vs. nn.Linear's [out, in])."""
    dims = [(2, 5), (5, 3), (3, 1)]
    params = []
    keys = jax.random.split(key, 2 * len(dims))
    for idx, (fan_in, fan_out) in enumerate(dims):
        bound = 1.0 / jnp.sqrt(jnp.float32(fan_in))
        w = jax.random.uniform(keys[2 * idx], (fan_in, fan_out),
                               minval=-bound, maxval=bound, dtype=jnp.float32)
        b = jax.random.uniform(keys[2 * idx + 1], (1, fan_out),
                               minval=-bound, maxval=bound, dtype=jnp.float32)
        params.extend([w, b])
    return tuple(params)


def reference_forward(x, params):
    w1, b1, w2, b2, w3, b3 = params
    h1 = jnp.maximum(x @ w1 + b1, 0.0)
    h2 = jnp.maximum(h1 @ w2 + b2, 0.0)
    return jax.nn.sigmoid(h2 @ w3 + b3)


if __name__ == "__main__":
    key = jax.random.PRNGKey(0)
    k_x, k_p, k_x2 = jax.random.split(key, 3)
    params = init_params(k_p)

    # Small batch (single (8,128) block path), matching the demo's tiny model.
    batch = 16
    x = jax.random.normal(k_x, (batch, 2), dtype=jnp.float32)
    out = jax.block_until_ready(cl_model_forward(x, params))
    ref = reference_forward(x, params)
    assert out.shape == (batch, 1)
    assert jnp.allclose(out, ref, atol=1e-5, rtol=1e-5)

    # Larger batch to exercise the wide-lane, multi-step grid path.
    batch2 = 20000
    x2 = jax.random.normal(k_x2, (batch2, 2), dtype=jnp.float32)
    out2 = jax.block_until_ready(cl_model_forward(x2, params))
    ref2 = reference_forward(x2, params)
    assert out2.shape == (batch2, 1)
    assert jnp.allclose(out2, ref2, atol=1e-5, rtol=1e-5)

    print("KERNEL_OK")
</pallas_src>

<mosaic_0001>
module attributes {stable_mosaic.version = 11 : i64} {
  func.func @mlp_kernel(%arg0: i32, %arg1: memref<37xf32, #tpu.memory_space<smem>>, %arg2: memref<2x8x128xf32, #tpu.memory_space<vmem>>, %arg3: memref<8x128xf32, #tpu.memory_space<vmem>>) attributes {dimension_semantics = [#tpu.dimension_semantics<parallel>], iteration_bounds = array<i64: 1>, scalar_prefetch = 0 : i64, scratch_operands = 0 : i64, tpu.core_type = #tpu.core_type<tc>, window_params = [{transform_indices = @transform_0, window_bounds = array<i64: 37>}, {transform_indices = @transform_1, window_bounds = array<i64: 2, 8, 128>}, {transform_indices = @transform_2, window_bounds = array<i64: 8, 128>}]} {
    %c0 = arith.constant 0 : index
    %c0_0 = arith.constant 0 : index
    %c0_1 = arith.constant 0 : index
    %0 = vector.load %arg2[%c0, %c0_0, %c0_1] : memref<2x8x128xf32, #tpu.memory_space<vmem>>, vector<1x8x128xf32>
    %1 = vector.shape_cast %0 : vector<1x8x128xf32> to vector<8x128xf32>
    %c1 = arith.constant 1 : index
    %c0_2 = arith.constant 0 : index
    %c0_3 = arith.constant 0 : index
    %2 = vector.load %arg2[%c1, %c0_2, %c0_3] : memref<2x8x128xf32, #tpu.memory_space<vmem>>, vector<1x8x128xf32>
    %3 = vector.shape_cast %2 : vector<1x8x128xf32> to vector<8x128xf32>
    %c0_4 = arith.constant 0 : index
    %4 = memref.load %arg1[%c0_4] : memref<37xf32, #tpu.memory_space<smem>>
    %5 = vector.broadcast %4 : f32 to vector<8x128xf32>
    %6 = arith.mulf %1, %5 : vector<8x128xf32>
    %c5 = arith.constant 5 : index
    %7 = memref.load %arg1[%c5] : memref<37xf32, #tpu.memory_space<smem>>
    %8 = vector.broadcast %7 : f32 to vector<8x128xf32>
    %9 = arith.mulf %3, %8 : vector<8x128xf32>
    %10 = arith.addf %6, %9 : vector<8x128xf32>
    %c10 = arith.constant 10 : index
    %11 = memref.load %arg1[%c10] : memref<37xf32, #tpu.memory_space<smem>>
    %12 = vector.broadcast %11 : f32 to vector<8x128xf32>
    %13 = arith.addf %10, %12 : vector<8x128xf32>
    %cst = arith.constant 0.000000e+00 : f32
    %14 = vector.broadcast %cst : f32 to vector<8x128xf32>
    %15 = arith.maximumf %13, %14 : vector<8x128xf32>
    %c15 = arith.constant 15 : index
    %16 = memref.load %arg1[%c15] : memref<37xf32, #tpu.memory_space<smem>>
    %17 = vector.broadcast %16 : f32 to vector<8x128xf32>
    %18 = arith.mulf %15, %17 : vector<8x128xf32>
    %c16 = arith.constant 16 : index
    %19 = memref.load %arg1[%c16] : memref<37xf32, #tpu.memory_space<smem>>
    %20 = vector.broadcast %19 : f32 to vector<8x128xf32>
    %21 = arith.mulf %15, %20 : vector<8x128xf32>
    %c17 = arith.constant 17 : index
    %22 = memref.load %arg1[%c17] : memref<37xf32, #tpu.memory_space<smem>>
    %23 = vector.broadcast %22 : f32 to vector<8x128xf32>
    %24 = arith.mulf %15, %23 : vector<8x128xf32>
    %c1_5 = arith.constant 1 : index
    %25 = memref.load %arg1[%c1_5] : memref<37xf32, #tpu.memory_space<smem>>
    %26 = vector.broadcast %25 : f32 to vector<8x128xf32>
    %27 = arith.mulf %1, %26 : vector<8x128xf32>
    %c6 = arith.constant 6 : index
    %28 = memref.load %arg1[%c6] : memref<37xf32, #tpu.memory_space<smem>>
    %29 = vector.broadcast %28 : f32 to vector<8x128xf32>
    %30 = arith.mulf %3, %29 : vector<8x128xf32>
    %31 = arith.addf %27, %30 : vector<8x128xf32>
    %c11 = arith.constant 11 : index
    %32 = memref.load %arg1[%c11] : memref<37xf32, #tpu.memory_space<smem>>
    %33 = vector.broadcast %32 : f32 to vector<8x128xf32>
    %34 = arith.addf %31, %33 : vector<8x128xf32>
    %cst_6 = arith.constant 0.000000e+00 : f32
    %35 = vector.broadcast %cst_6 : f32 to vector<8x128xf32>
    %36 = arith.maximumf %34, %35 : vector<8x128xf32>
    %c18 = arith.constant 18 : index
    %37 = memref.load %arg1[%c18] : memref<37xf32, #tpu.memory_space<smem>>
    %38 = vector.broadcast %37 : f32 to vector<8x128xf32>
    %39 = arith.mulf %36, %38 : vector<8x128xf32>
    %40 = arith.addf %18, %39 : vector<8x128xf32>
    %c19 = arith.constant 19 : index
    %41 = memref.load %arg1[%c19] : memref<37xf32, #tpu.memory_space<smem>>
    %42 = vector.broadcast %41 : f32 to vector<8x128xf32>
    %43 = arith.mulf %36, %42 : vector<8x128xf32>
    %44 = arith.addf %21, %43 : vector<8x128xf32>
    %c20 = arith.constant 20 : index
    %45 = memref.load %arg1[%c20] : memref<37xf32, #tpu.memory_space<smem>>
    %46 = vector.broadcast %45 : f32 to vector<8x128xf32>
    %47 = arith.mulf %36, %46 : vector<8x128xf32>
    %48 = arith.addf %24, %47 : vector<8x128xf32>
    %c2 = arith.constant 2 : index
    %49 = memref.load %arg1[%c2] : memref<37xf32, #tpu.memory_space<smem>>
    %50 = vector.broadcast %49 : f32 to vector<8x128xf32>
    %51 = arith.mulf %1, %50 : vector<8x128xf32>
    %c7 = arith.constant 7 : index
    %52 = memref.load %arg1[%c7] : memref<37xf32, #tpu.memory_space<smem>>
    %53 = vector.broadcast %52 : f32 to vector<8x128xf32>
    %54 = arith.mulf %3, %53 : vector<8x128xf32>
    %55 = arith.addf %51, %54 : vector<8x128xf32>
    %c12 = arith.constant 12 : index
    %56 = memref.load %arg1[%c12] : memref<37xf32, #tpu.memory_space<smem>>
    %57 = vector.broadcast %56 : f32 to vector<8x128xf32>
    %58 = arith.addf %55, %57 : vector<8x128xf32>
    %cst_7 = arith.constant 0.000000e+00 : f32
    %59 = vector.broadcast %cst_7 : f32 to vector<8x128xf32>
    %60 = arith.maximumf %58, %59 : vector<8x128xf32>
    %c21 = arith.constant 21 : index
    %61 = memref.load %arg1[%c21] : memref<37xf32, #tpu.memory_space<smem>>
    %62 = vector.broadcast %61 : f32 to vector<8x128xf32>
    %63 = arith.mulf %60, %62 : vector<8x128xf32>
    %64 = arith.addf %40, %63 : vector<8x128xf32>
    %c22 = arith.constant 22 : index
    %65 = memref.load %arg1[%c22] : memref<37xf32, #tpu.memory_space<smem>>
    %66 = vector.broadcast %65 : f32 to vector<8x128xf32>
    %67 = arith.mulf %60, %66 : vector<8x128xf32>
    %68 = arith.addf %44, %67 : vector<8x128xf32>
    %c23 = arith.constant 23 : index
    %69 = memref.load %arg1[%c23] : memref<37xf32, #tpu.memory_space<smem>>
    %70 = vector.broadcast %69 : f32 to vector<8x128xf32>
    %71 = arith.mulf %60, %70 : vector<8x128xf32>
    %72 = arith.addf %48, %71 : vector<8x128xf32>
    %c3 = arith.constant 3 : index
    %73 = memref.load %arg1[%c3] : memref<37xf32, #tpu.memory_space<smem>>
    %74 = vector.broadcast %73 : f32 to vector<8x128xf32>
    %75 = arith.mulf %1, %74 : vector<8x128xf32>
    %c8 = arith.constant 8 : index
    %76 = memref.load %arg1[%c8] : memref<37xf32, #tpu.memory_space<smem>>
    %77 = vector.broadcast %76 : f32 to vector<8x128xf32>
    %78 = arith.mulf %3, %77 : vector<8x128xf32>
    %79 = arith.addf %75, %78 : vector<8x128xf32>
    %c13 = arith.constant 13 : index
    %80 = memref.load %arg1[%c13] : memref<37xf32, #tpu.memory_space<smem>>
    %81 = vector.broadcast %80 : f32 to vector<8x128xf32>
    %82 = arith.addf %79, %81 : vector<8x128xf32>
    %cst_8 = arith.constant 0.000000e+00 : f32
    %83 = vector.broadcast %cst_8 : f32 to vector<8x128xf32>
    %84 = arith.maximumf %82, %83 : vector<8x128xf32>
    %c24 = arith.constant 24 : index
    %85 = memref.load %arg1[%c24] : memref<37xf32, #tpu.memory_space<smem>>
    %86 = vector.broadcast %85 : f32 to vector<8x128xf32>
    %87 = arith.mulf %84, %86 : vector<8x128xf32>
    %88 = arith.addf %64, %87 : vector<8x128xf32>
    %c25 = arith.constant 25 : index
    %89 = memref.load %arg1[%c25] : memref<37xf32, #tpu.memory_space<smem>>
    %90 = vector.broadcast %89 : f32 to vector<8x128xf32>
    %91 = arith.mulf %84, %90 : vector<8x128xf32>
    %92 = arith.addf %68, %91 : vector<8x128xf32>
    %c26 = arith.constant 26 : index
    %93 = memref.load %arg1[%c26] : memref<37xf32, #tpu.memory_space<smem>>
    %94 = vector.broadcast %93 : f32 to vector<8x128xf32>
    %95 = arith.mulf %84, %94 : vector<8x128xf32>
    %96 = arith.addf %72, %95 : vector<8x128xf32>
    %c4 = arith.constant 4 : index
    %97 = memref.load %arg1[%c4] : memref<37xf32, #tpu.memory_space<smem>>
    %98 = vector.broadcast %97 : f32 to vector<8x128xf32>
    %99 = arith.mulf %1, %98 : vector<8x128xf32>
    %c9 = arith.constant 9 : index
    %100 = memref.load %arg1[%c9] : memref<37xf32, #tpu.memory_space<smem>>
    %101 = vector.broadcast %100 : f32 to vector<8x128xf32>
    %102 = arith.mulf %3, %101 : vector<8x128xf32>
    %103 = arith.addf %99, %102 : vector<8x128xf32>
    %c14 = arith.constant 14 : index
    %104 = memref.load %arg1[%c14] : memref<37xf32, #tpu.memory_space<smem>>
    %105 = vector.broadcast %104 : f32 to vector<8x128xf32>
    %106 = arith.addf %103, %105 : vector<8x128xf32>
    %cst_9 = arith.constant 0.000000e+00 : f32
    %107 = vector.broadcast %cst_9 : f32 to vector<8x128xf32>
    %108 = arith.maximumf %106, %107 : vector<8x128xf32>
    %c27 = arith.constant 27 : index
    %109 = memref.load %arg1[%c27] : memref<37xf32, #tpu.memory_space<smem>>
    %110 = vector.broadcast %109 : f32 to vector<8x128xf32>
    %111 = arith.mulf %108, %110 : vector<8x128xf32>
    %112 = arith.addf %88, %111 : vector<8x128xf32>
    %c28 = arith.constant 28 : index
    %113 = memref.load %arg1[%c28] : memref<37xf32, #tpu.memory_space<smem>>
    %114 = vector.broadcast %113 : f32 to vector<8x128xf32>
    %115 = arith.mulf %108, %114 : vector<8x128xf32>
    %116 = arith.addf %92, %115 : vector<8x128xf32>
    %c29 = arith.constant 29 : index
    %117 = memref.load %arg1[%c29] : memref<37xf32, #tpu.memory_space<smem>>
    %118 = vector.broadcast %117 : f32 to vector<8x128xf32>
    %119 = arith.mulf %108, %118 : vector<8x128xf32>
    %120 = arith.addf %96, %119 : vector<8x128xf32>
    %c30 = arith.constant 30 : index
    %121 = memref.load %arg1[%c30] : memref<37xf32, #tpu.memory_space<smem>>
    %122 = vector.broadcast %121 : f32 to vector<8x128xf32>
    %123 = arith.addf %112, %122 : vector<8x128xf32>
    %cst_10 = arith.constant 0.000000e+00 : f32
    %124 = vector.broadcast %cst_10 : f32 to vector<8x128xf32>
    %125 = arith.maximumf %123, %124 : vector<8x128xf32>
    %c33 = arith.constant 33 : index
    %126 = memref.load %arg1[%c33] : memref<37xf32, #tpu.memory_space<smem>>
    %127 = vector.broadcast %126 : f32 to vector<8x128xf32>
    %128 = arith.mulf %125, %127 : vector<8x128xf32>
    %c31 = arith.constant 31 : index
    %129 = memref.load %arg1[%c31] : memref<37xf32, #tpu.memory_space<smem>>
    %130 = vector.broadcast %129 : f32 to vector<8x128xf32>
    %131 = arith.addf %116, %130 : vector<8x128xf32>
    %cst_11 = arith.constant 0.000000e+00 : f32
    %132 = vector.broadcast %cst_11 : f32 to vector<8x128xf32>
    %133 = arith.maximumf %131, %132 : vector<8x128xf32>
    %c34 = arith.constant 34 : index
    %134 = memref.load %arg1[%c34] : memref<37xf32, #tpu.memory_space<smem>>
    %135 = vector.broadcast %134 : f32 to vector<8x128xf32>
    %136 = arith.mulf %133, %135 : vector<8x128xf32>
    %137 = arith.addf %128, %136 : vector<8x128xf32>
    %c32 = arith.constant 32 : index
    %138 = memref.load %arg1[%c32] : memref<37xf32, #tpu.memory_space<smem>>
    %139 = vector.broadcast %138 : f32 to vector<8x128xf32>
    %140 = arith.addf %120, %139 : vector<8x128xf32>
    %cst_12 = arith.constant 0.000000e+00 : f32
    %141 = vector.broadcast %cst_12 : f32 to vector<8x128xf32>
    %142 = arith.maximumf %140, %141 : vector<8x128xf32>
    %c35 = arith.constant 35 : index
    %143 = memref.load %arg1[%c35] : memref<37xf32, #tpu.memory_space<smem>>
    %144 = vector.broadcast %143 : f32 to vector<8x128xf32>
    %145 = arith.mulf %142, %144 : vector<8x128xf32>
    %146 = arith.addf %137, %145 : vector<8x128xf32>
    %c36 = arith.constant 36 : index
    %147 = memref.load %arg1[%c36] : memref<37xf32, #tpu.memory_space<smem>>
    %148 = vector.broadcast %147 : f32 to vector<8x128xf32>
    %149 = arith.addf %146, %148 : vector<8x128xf32>
    %cst_13 = arith.constant 5.000000e-01 : f32
    %150 = vector.broadcast %cst_13 : f32 to vector<8x128xf32>
    %151 = arith.mulf %150, %149 : vector<8x128xf32>
    %152 = math.tanh %151 : vector<8x128xf32>
    %cst_14 = arith.constant 5.000000e-01 : f32
    %153 = vector.broadcast %cst_14 : f32 to vector<8x128xf32>
    %154 = arith.mulf %153, %152 : vector<8x128xf32>
    %cst_15 = arith.constant 5.000000e-01 : f32
    %155 = vector.broadcast %cst_15 : f32 to vector<8x128xf32>
    %156 = arith.addf %154, %155 : vector<8x128xf32>
    %c0_16 = arith.constant 0 : index
    %c0_17 = arith.constant 0 : index
    %157 = vector.load %arg3[%c0_16, %c0_17] : memref<8x128xf32, #tpu.memory_space<vmem>>, vector<8x128xf32>
    tpu.vector_store %arg3[%c0_16, %c0_17], %156 {strides = array<i32>} : memref<8x128xf32, #tpu.memory_space<vmem>>, vector<8x128xf32>,
    return
  }
  func.func @transform_0(%arg0: i32) -> i32 {
    %c0_i32 = arith.constant 0 : i32
    %c0_i32_0 = arith.constant 0 : i32
    return %c0_i32 : i32
  }
  func.func @transform_1(%arg0: i32) -> (i32, i32, i32) {
    %c0_i32 = arith.constant 0 : i32
    %c0_i32_0 = arith.constant 0 : i32
    %c0_i32_1 = arith.constant 0 : i32
    return %c0_i32, %arg0, %c0_i32_0 : i32, i32, i32
  }
  func.func @transform_2(%arg0: i32) -> (i32, i32) {
    %c0_i32 = arith.constant 0 : i32
    %c0_i32_0 = arith.constant 0 : i32
    return %arg0, %c0_i32 : i32, i32
  }
}

</mosaic_0001>

<llo_original>
// kernel: tpu_custom_call.1
$region0: #{tpu_custom_call.1}
  #allocation0 [shape = 'u32[]', space=smem, size = 0x4, offset = 0x4, fixed_abs, tag = 'smem constant byte address 0x4 - core index']
  #allocation1 [shape = 'u32[72,128]{1,0:T(1,128)}', space=vmem, size = 0x9000, scoped, tag = 'internal scratch']
  %s0 = inlined_call_operand.hbm [shape: f32[37], index: 0, kind: input, shape index: {}]
  %s1 = inlined_call_operand.hbm [shape: f32[2,8,128], index: 1, kind: input, shape index: {}]
  %s2 = inlined_call_operand.hbm [shape: f32[8,128], index: 2, kind: output, shape index: {}]
  %s3 = sld [smem:[#allocation0]]
  $region26: #{tpu_custom_call.1} parent=0
    _
  %s5 = ssub.s32 1, %s3
  %s6 = scalar_select 0, %s5, %s3
  $region1: #{tpu_custom_call.1} parent=0
    #allocation2 [shape = 'u8[512]{0}', space=smem, size = 0x200, scoped, tag = 'input window, operand 0, single buffered']
    #allocation3 [shape = 's32[1]{0}', space=sflag, size = 0x4, scoped, tag = 'scoped memory for tpu_custom_call.1']
    #allocation4 [shape = 's32[1]{0}', space=sflag, size = 0x4, scoped, tag = 'scoped memory for tpu_custom_call.1']
    #allocation5 [shape = 's32[1]{0}', space=sflag, size = 0x4, scoped, tag = 'scoped memory for tpu_custom_call.1']
    #allocation6 [shape = 'u8[8192]{0}', space=vmem, size = 0x2000, scoped, tag = 'input window, operand 1, single buffered']
    #allocation7 [shape = 'u8[4096]{0}', space=vmem, size = 0x1000, scoped, tag = 'output window, operand 0, single buffered']
    %7 = vsyncpa [#allocation5], 0
    %8 = vsyncpa [#allocation3], 0
    %9 = vsyncpa [#allocation4], 0
    // Predicated region
    $region2: #{tpu_custom_call.1} parent=1 // pred_check
      _
    $region3: #{tpu_custom_call.1} parent=1 // pred_check_branch
      %11 = sbr.rel (0) target = $region5
    $region4: #{tpu_custom_call.1} parent=1 // pred_region
      %13 = vsyncadd [#allocation5], 0
      %s15 = sshll.u32 %s0, 4
      %s16 = int_to_ptr.hbm [resolvable:$true] %s15
      %18 = dma.hbm_to_smem %s16, 16, [#allocation2], [#allocation5]
    $region5: #{tpu_custom_call.1} parent=1 // pred_fallthru
      _
    // Predicated region
    $region6: #{tpu_custom_call.1} parent=1 // pred_check
      _
    $region7: #{tpu_custom_call.1} parent=1 // pred_check_branch
      %20 = sbr.rel (0) target = $region9
    $region8: #{tpu_custom_call.1} parent=1 // pred_region
      %22 = vsyncadd [#allocation3], 0
      %s23 = sshll.u32 %s1, 4
      %s24 = int_to_ptr.hbm [resolvable:$true] %s23
      %s25 = sshll.u32 [#allocation6], 4
      %s26 = int_to_ptr.vmem [resolvable:$true] %s25
      %31 = dma.hbm_to_vmem [thread:$0]  %s24, 256, %s26, [#allocation3], 128, 128, 8
    $region9: #{tpu_custom_call.1} parent=1 // pred_fallthru
      _
    // Predicated region
    $region10: #{tpu_custom_call.1} parent=1 // pred_check
      _
    $region11: #{tpu_custom_call.1} parent=1 // pred_check_branch
      %33 = sbr.rel (0) target = $region13
    $region12: #{tpu_custom_call.1} parent=1 // pred_region
      %35 = dma.done [#allocation5], 16
    $region13: #{tpu_custom_call.1} parent=1 // pred_fallthru
      _
    // Predicated region
    $region14: #{tpu_custom_call.1} parent=1 // pred_check
      _
    $region15: #{tpu_custom_call.1} parent=1 // pred_check_branch
      %37 = sbr.rel (0) target = $region17
    $region16: #{tpu_custom_call.1} parent=1 // pred_region
      %39 = dma.done [#allocation3], 256
    $region17: #{tpu_custom_call.1} parent=1 // pred_fallthru
      _
    %40 = sfence
    %v41 = vld [vmem:[#allocation6] sm:$0xff]
    %s42 = scalar_lea.vmem [#allocation6], 8
    %v43 = vld [vmem:[%s42] sm:$0xff]
    %s44 = sld [smem:[#allocation2]]
    %v45 = vstv %s44
    %v46 = vmul.f32 %v41, %v45
    %s47 = sld [smem:[#allocation2 + $0x5]]
    %v48 = vstv %s47
    %v49 = vmul.f32 %v43, %v48
    %v50 = vadd.f32 %v46, %v49
    %s51 = sld [smem:[#allocation2 + $0xa]]
    %v52 = vstv %s51
    %v53 = vadd.f32 %v50, %v52
    %v54 = vmax.f32 %v53, 0.0
    %s55 = sld [smem:[#allocation2 + $0xf]]
    %v56 = vstv %s55
    %v57 = vmul.f32 %v54, %v56
    %s58 = sld [smem:[#allocation2 + $0x10]]
    %v59 = vstv %s58
    %v60 = vmul.f32 %v54, %v59
    %s61 = sld [smem:[#allocation2 + $0x11]]
    %v62 = vstv %s61
    %v63 = vmul.f32 %v54, %v62
    %s64 = sld [smem:[#allocation2 + $0x1]]
    %v65 = vstv %s64
    %v66 = vmul.f32 %v41, %v65
    %s67 = sld [smem:[#allocation2 + $0x6]]
    %v68 = vstv %s67
    %v69 = vmul.f32 %v43, %v68
    %v70 = vadd.f32 %v66, %v69
    %s71 = sld [smem:[#allocation2 + $0xb]]
    %v72 = vstv %s71
    %v73 = vadd.f32 %v70, %v72
    %v74 = vmax.f32 %v73, 0.0
    %s75 = sld [smem:[#allocation2 + $0x12]]
    %v76 = vstv %s75
    %v77 = vmul.f32 %v74, %v76
    %v78 = vadd.f32 %v57, %v77
    %s79 = sld [smem:[#allocation2 + $0x13]]
    %v80 = vstv %s79
    %v81 = vmul.f32 %v74, %v80
    %v82 = vadd.f32 %v60, %v81
    %s83 = sld [smem:[#allocation2 + $0x14]]
    %v84 = vstv %s83
    %v85 = vmul.f32 %v74, %v84
    %v86 = vadd.f32 %v63, %v85
    %s87 = sld [smem:[#allocation2 + $0x2]]
    %v88 = vstv %s87
    %v89 = vmul.f32 %v41, %v88
    %s90 = sld [smem:[#allocation2 + $0x7]]
    %v91 = vstv %s90
    %v92 = vmul.f32 %v43, %v91
    %v93 = vadd.f32 %v89, %v92
    %s94 = sld [smem:[#allocation2 + $0xc]]
    %v95 = vstv %s94
    %v96 = vadd.f32 %v93, %v95
    %v97 = vmax.f32 %v96, 0.0
    %s98 = sld [smem:[#allocation2 + $0x15]]
    %v99 = vstv %s98
    %v100 = vmul.f32 %v97, %v99
    %v101 = vadd.f32 %v78, %v100
    %s102 = sld [smem:[#allocation2 + $0x16]]
    %v103 = vstv %s102
    %v104 = vmul.f32 %v97, %v103
    %v105 = vadd.f32 %v82, %v104
    %s106 = sld [smem:[#allocation2 + $0x17]]
    %v107 = vstv %s106
    %v108 = vmul.f32 %v97, %v107
    %v109 = vadd.f32 %v86, %v108
    %s110 = sld [smem:[#allocation2 + $0x3]]
    %v111 = vstv %s110
    %v112 = vmul.f32 %v41, %v111
    %s113 = sld [smem:[#allocation2 + $0x8]]
    %v114 = vstv %s113
    %v115 = vmul.f32 %v43, %v114
    %v116 = vadd.f32 %v112, %v115
    %s117 = sld [smem:[#allocation2 + $0xd]]
    %v118 = vstv %s117
    %v119 = vadd.f32 %v116, %v118
    %v120 = vmax.f32 %v119, 0.0
    %s121 = sld [smem:[#allocation2 + $0x18]]
    %v122 = vstv %s121
    %v123 = vmul.f32 %v120, %v122
    %v124 = vadd.f32 %v101, %v123
    %s125 = sld [smem:[#allocation2 + $0x19]]
    %v126 = vstv %s125
    %v127 = vmul.f32 %v120, %v126
    %v128 = vadd.f32 %v105, %v127
    %s129 = sld [smem:[#allocation2 + $0x1a]]
    %v130 = vstv %s129
    %v131 = vmul.f32 %v120, %v130
    %v132 = vadd.f32 %v109, %v131
    %s133 = sld [smem:[#allocation2 + $0x4]]
    %v134 = vstv %s133
    %v135 = vmul.f32 %v41, %v134
    %s136 = sld [smem:[#allocation2 + $0x9]]
    %v137 = vstv %s136
    %v138 = vmul.f32 %v43, %v137
    %v139 = vadd.f32 %v135, %v138
    %s140 = sld [smem:[#allocation2 + $0xe]]
    %v141 = vstv %s140
    %v142 = vadd.f32 %v139, %v141
    %v143 = vmax.f32 %v142, 0.0
    %s144 = sld [smem:[#allocation2 + $0x1b]]
    %v145 = vstv %s144
    %v146 = vmul.f32 %v143, %v145
    %v147 = vadd.f32 %v124, %v146
    %s148 = sld [smem:[#allocation2 + $0x1c]]
    %v149 = vstv %s148
    %v150 = vmul.f32 %v143, %v149
    %v151 = vadd.f32 %v128, %v150
    %s152 = sld [smem:[#allocation2 + $0x1d]]
    %v153 = vstv %s152
    %v154 = vmul.f32 %v143, %v153
    %v155 = vadd.f32 %v132, %v154
    %s156 = sld [smem:[#allocation2 + $0x1e]]
    %v157 = vstv %s156
    %v158 = vadd.f32 %v147, %v157
    %v159 = vmax.f32 %v158, 0.0
    %s160 = sld [smem:[#allocation2 + $0x21]]
    %v161 = vstv %s160
    %v162 = vmul.f32 %v159, %v161
    %s163 = sld [smem:[#allocation2 + $0x1f]]
    %v164 = vstv %s163
    %v165 = vadd.f32 %v151, %v164
    %v166 = vmax.f32 %v165, 0.0
    %s167 = sld [smem:[#allocation2 + $0x22]]
    %v168 = vstv %s167
    %v169 = vmul.f32 %v166, %v168
    %v170 = vadd.f32 %v162, %v169
    %s171 = sld [smem:[#allocation2 + $0x20]]
    %v172 = vstv %s171
    %v173 = vadd.f32 %v155, %v172
    %v174 = vmax.f32 %v173, 0.0
    %s175 = sld [smem:[#allocation2 + $0x23]]
    %v176 = vstv %s175
    %v177 = vmul.f32 %v174, %v176
    %v178 = vadd.f32 %v170, %v177
    %s179 = sld [smem:[#allocation2 + $0x24]]
    %v180 = vstv %s179
    %v181 = vadd.f32 %v178, %v180
    %v182 = vmul.f32 %v181, 0.5
    %v183 = vtanh.pop %v182
    %v184 = vmul.f32 %v183, 0.5
    %v185 = vadd.f32 %v184, 0.5
    %186 = vst [vmem:[#allocation7] sm:$0xff] %v185
    // Predicated region
    $region18: #{tpu_custom_call.1} parent=1 // pred_check
      _
    $region19: #{tpu_custom_call.1} parent=1 // pred_check_branch
      %188 = sbr.rel (0) target = $region21
    $region20: #{tpu_custom_call.1} parent=1 // pred_region
      %190 = vsyncadd [#allocation4], 0
      %s192 = sshll.u32 [#allocation7], 4
      %s193 = int_to_ptr.vmem [resolvable:$true] %s192
      %s194 = sshll.u32 %s2, 4
      %s195 = int_to_ptr.hbm [resolvable:$true] %s194
      %197 = dma.vmem_to_hbm [thread:$0]  %s193, 128, %s195, [#allocation4]
    $region21: #{tpu_custom_call.1} parent=1 // pred_fallthru
      _
    // Predicated region
    $region22: #{tpu_custom_call.1} parent=1 // pred_check
      _
    $region23: #{tpu_custom_call.1} parent=1 // pred_check_branch
      %199 = sbr.rel (0) target = $region25
    $region24: #{tpu_custom_call.1} parent=1 // pred_region
      %201 = dma.done [#allocation4], 128
    $region25: #{tpu_custom_call.1} parent=1 // pred_fallthru
      _
    %202 = vsyncpa [#allocation3], 1
    %203 = vsyncpa [#allocation4], 1
    %204 = vsyncpa [#allocation5], 1

</llo_original>
